<compile_context>
chip_gen: v6e
topology: v6e:2x2x1
jax: 0.10.0
libtpu: 0.0.40
codegen_flags: <defaults>
</compile_context>

<pallas_src>
from functools import partial

import jax
import jax.numpy as jnp
from jax.experimental import pallas as pl
from jax.experimental.pallas import tpu as pltpu

_TM_CAP = 512                       # rows per batch tile
_TN_CAP = 2048                      # output columns per tile (bounds weight VMEM)
_VMEM_LIMIT = 48 * 1024 * 1024      # > v5e(16)/v6e(32) MiB scoped defaults, < v7x 64 MiB


def _round_up(n: int, m: int) -> int:
    return ((n + m - 1) // m) * m


def _cdiv(n: int, m: int) -> int:
    return (n + m - 1) // m


def _gate_kernel(x_ref, r_ref, wx_ref, wr_ref, b_ref, o_ref):
    # cat([x, ref]) @ W.T == x @ Wx + ref @ Wr   (Wx/Wr are pre-transposed halves).
    # bf16 MXU operands, f32 accumulation; bias add and tanh stay in f32.
    cd = wx_ref.dtype
    acc = jnp.dot(x_ref[...].astype(cd), wx_ref[...],
                  preferred_element_type=jnp.float32)
    acc = acc + jnp.dot(r_ref[...].astype(cd), wr_ref[...],
                        preferred_element_type=jnp.float32)
    acc = acc + b_ref[...]                         # (1, TN) f32, broadcasts over rows
    o_ref[...] = jnp.tanh(acc).astype(o_ref.dtype)


def _spec(block_shape, index_map, single_buffer=False):
    """BlockSpec helper; single-buffers grid-invariant operands when supported."""
    if single_buffer:
        try:
            return pl.BlockSpec(block_shape, index_map, pipeline_mode=pl.Buffered(1))
        except (TypeError, AttributeError):
            pass
    return pl.BlockSpec(block_shape, index_map)


def prepare_gate_params(weight, bias, x_features=None, compute_dtype=jnp.bfloat16):
    """One-time parameter prep (NOT in the per-call path).

    weight: [out_size, in_size]  (PyTorch Linear layout, in_size = dim(x)+dim(ref))
    bias:   [out_size]
    x_features: dim(x); defaults to in_size // 2 (equal halves).
    Returns (wx, wr, b2):
      wx [Fx, out_pad] bf16,  wr [Fr, out_pad] bf16,  b2 [1, out_pad] f32,
    with out_pad = round_up(out_size, 128) and zero-padded columns.
    """
    out_size, in_size = weight.shape
    if x_features is None:
        assert in_size % 2 == 0, "pass x_features explicitly for unequal x/ref widths"
        x_features = in_size // 2
    fx = int(x_features)
    fr = in_size - fx
    assert 0 < fx < in_size
    out_pad = _round_up(out_size, 128)

    w_t = weight.T.astype(compute_dtype)                   # [in_size, out_size]
    wx = jnp.zeros((fx, out_pad), compute_dtype).at[:, :out_size].set(w_t[:fx])
    wr = jnp.zeros((fr, out_pad), compute_dtype).at[:, :out_size].set(w_t[fx:])
    b2 = jnp.zeros((1, out_pad), jnp.float32).at[0, :out_size].set(
        bias.astype(jnp.float32))
    return wx, wr, b2


@partial(jax.jit, static_argnames=("out_size",))
def gate_forward(x, ref, wx, wr, b2, out_size):
    """x: [B, Fx]; ref: [B, Fr]; (wx, wr, b2) from prepare_gate_params -> [B, out_size]."""
    B, fx = x.shape
    _, fr = ref.shape
    assert ref.shape[0] == B and wx.shape[0] == fx and wr.shape[0] == fr
    out_pad = wx.shape[1]

    # Batch tiling: no jnp.pad copies; Pallas masks the ragged last block.
    # TM guarantees >= 2 grid steps whenever B > 8 (dual-TC sharding on v7x).
    TM = min(_TM_CAP, max(8, _round_up(_cdiv(B, 2), 8)))
    TN = min(out_pad, _TN_CAP)
    grid = (_cdiv(B, TM), _cdiv(out_pad, TN))
    weights_invariant = grid[1] == 1    # N axis collapses -> weights never change

    out = pl.pallas_call(
        _gate_kernel,
        out_shape=jax.ShapeDtypeStruct((B, out_pad), x.dtype),
        grid=grid,
        in_specs=[
            _spec((TM, fx), lambda i, j: (i, 0)),                       # x tile
            _spec((TM, fr), lambda i, j: (i, 0)),                       # ref tile
            _spec((fx, TN), lambda i, j: (0, j), weights_invariant),    # Wx
            _spec((fr, TN), lambda i, j: (0, j), weights_invariant),    # Wr
            _spec((1, TN), lambda i, j: (0, j), weights_invariant),     # bias
        ],
        out_specs=pl.BlockSpec((TM, TN), lambda i, j: (i, j)),
        compiler_params=pltpu.CompilerParams(
            dimension_semantics=("parallel", "parallel"),
            vmem_limit_bytes=_VMEM_LIMIT,
        ),
    )(x, ref, wx, wr, b2)

    # TODO(synk): let consumers keep the 128-padded width (and/or bf16 output) to
    # skip this slice/copy entirely when they tolerate it.
    return out[:, :out_size]


if __name__ == "__main__":
    key = jax.random.PRNGKey(0)
    k_x, k_r, k_w, k_b = jax.random.split(key, 4)

    # Gate(in_size=2*F, out_size): x and ref each carry F features.
    B, F, out_size = 8, 32, 16
    in_size = 2 * F

    x = jax.random.normal(k_x, (B, F), dtype=jnp.float32)
    ref = jax.random.normal(k_r, (B, F), dtype=jnp.float32)

    # Deterministic parameter init (PyTorch Linear-style uniform bound).
    bound = 1.0 / jnp.sqrt(in_size)
    weight = jax.random.uniform(k_w, (out_size, in_size),
                                minval=-bound, maxval=bound, dtype=jnp.float32)
    bias = jax.random.uniform(k_b, (out_size,),
                              minval=-bound, maxval=bound, dtype=jnp.float32)

    # One-time prep (transpose / split / pad / bf16 cast) -- outside the per-call path.
    wx, wr, b2 = prepare_gate_params(weight, bias, x_features=F)

    out = gate_forward(x, ref, wx, wr, b2, out_size)
    out = jax.block_until_ready(out)

    # Reference check in plain JAX (matches the PyTorch f32 forward).  Tolerance is
    # loosened because matmul operands are bf16 (accumulation / bias / tanh are f32).
    ref_out = jnp.tanh(jnp.concatenate([x, ref], axis=-1) @ weight.T + bias)
    assert out.shape == (B, out_size)
    assert jnp.allclose(out, ref_out, atol=3e-2, rtol=1e-3)

    print("KERNEL_OK")
</pallas_src>

<mosaic_0001>
module attributes {stable_mosaic.version = 11 : i64} {
  func.func @_gate_kernel(%arg0: i32, %arg1: i32, %arg2: memref<8x32xf32, #tpu.memory_space<vmem>>, %arg3: memref<8x32xf32, #tpu.memory_space<vmem>>, %arg4: memref<32x128xbf16, #tpu.memory_space<vmem>>, %arg5: memref<32x128xbf16, #tpu.memory_space<vmem>>, %arg6: memref<1x128xf32, #tpu.memory_space<vmem>>, %arg7: memref<8x128xf32, #tpu.memory_space<vmem>>) attributes {dimension_semantics = [#tpu.dimension_semantics<parallel>, #tpu.dimension_semantics<parallel>], iteration_bounds = array<i64: 1, 1>, scalar_prefetch = 0 : i64, scratch_operands = 0 : i64, tpu.core_type = #tpu.core_type<tc>, window_params = [{transform_indices = @transform_0, window_bounds = array<i64: 8, 32>}, {transform_indices = @transform_1, window_bounds = array<i64: 8, 32>}, {pipeline_mode = #tpu.pipeline_mode<synchronous>, transform_indices = @transform_2, window_bounds = array<i64: 32, 128>}, {pipeline_mode = #tpu.pipeline_mode<synchronous>, transform_indices = @transform_3, window_bounds = array<i64: 32, 128>}, {pipeline_mode = #tpu.pipeline_mode<synchronous>, transform_indices = @transform_4, window_bounds = array<i64: 1, 128>}, {transform_indices = @transform_5, window_bounds = array<i64: 8, 128>}]} {
    %c0 = arith.constant 0 : index
    %c0_0 = arith.constant 0 : index
    %0 = vector.load %arg2[%c0, %c0_0] : memref<8x32xf32, #tpu.memory_space<vmem>>, vector<8x32xf32>
    %1 = arith.truncf %0 : vector<8x32xf32> to vector<8x32xbf16>
    %c0_1 = arith.constant 0 : index
    %c0_2 = arith.constant 0 : index
    %2 = vector.load %arg4[%c0_1, %c0_2] : memref<32x128xbf16, #tpu.memory_space<vmem>>, vector<32x128xbf16>
    %cst = arith.constant dense<0.000000e+00> : vector<8x128xf32>
    %3 = tpu.matmul %1, %2, %cst {dimension_numbers = #tpu.dot_dimension_numbers<[1], [0], [0], [1], [0, 0, 1, 1], [], []>} : vector<8x32xbf16>, vector<32x128xbf16>, vector<8x128xf32> -> vector<8x128xf32>
    %c0_3 = arith.constant 0 : index
    %c0_4 = arith.constant 0 : index
    %4 = vector.load %arg3[%c0_3, %c0_4] : memref<8x32xf32, #tpu.memory_space<vmem>>, vector<8x32xf32>
    %5 = arith.truncf %4 : vector<8x32xf32> to vector<8x32xbf16>
    %c0_5 = arith.constant 0 : index
    %c0_6 = arith.constant 0 : index
    %6 = vector.load %arg5[%c0_5, %c0_6] : memref<32x128xbf16, #tpu.memory_space<vmem>>, vector<32x128xbf16>
    %cst_7 = arith.constant dense<0.000000e+00> : vector<8x128xf32>
    %7 = tpu.matmul %5, %6, %cst_7 {dimension_numbers = #tpu.dot_dimension_numbers<[1], [0], [0], [1], [0, 0, 1, 1], [], []>} : vector<8x32xbf16>, vector<32x128xbf16>, vector<8x128xf32> -> vector<8x128xf32>
    %8 = arith.addf %3, %7 : vector<8x128xf32>
    %c0_8 = arith.constant 0 : index
    %c0_9 = arith.constant 0 : index
    %9 = vector.load %arg6[%c0_8, %c0_9] : memref<1x128xf32, #tpu.memory_space<vmem>>, vector<1x128xf32>
    %10 = vector.broadcast %9 : vector<1x128xf32> to vector<8x128xf32>
    %11 = arith.addf %8, %10 : vector<8x128xf32>
    %12 = math.tanh %11 : vector<8x128xf32>
    %c0_10 = arith.constant 0 : index
    %c0_11 = arith.constant 0 : index
    %13 = vector.load %arg7[%c0_10, %c0_11] : memref<8x128xf32, #tpu.memory_space<vmem>>, vector<8x128xf32>
    tpu.vector_store %arg7[%c0_10, %c0_11], %12 {strides = array<i32>} : memref<8x128xf32, #tpu.memory_space<vmem>>, vector<8x128xf32>,
    return
  }
  func.func @transform_0(%arg0: i32, %arg1: i32) -> (i32, i32) {
    %c0_i32 = arith.constant 0 : i32
    %c0_i32_0 = arith.constant 0 : i32
    return %arg0, %c0_i32 : i32, i32
  }
  func.func @transform_1(%arg0: i32, %arg1: i32) -> (i32, i32) {
    %c0_i32 = arith.constant 0 : i32
    %c0_i32_0 = arith.constant 0 : i32
    return %arg0, %c0_i32 : i32, i32
  }
  func.func @transform_2(%arg0: i32, %arg1: i32) -> (i32, i32) {
    %c0_i32 = arith.constant 0 : i32
    %c0_i32_0 = arith.constant 0 : i32
    return %c0_i32, %arg1 : i32, i32
  }
  func.func @transform_3(%arg0: i32, %arg1: i32) -> (i32, i32) {
    %c0_i32 = arith.constant 0 : i32
    %c0_i32_0 = arith.constant 0 : i32
    return %c0_i32, %arg1 : i32, i32
  }
  func.func @transform_4(%arg0: i32, %arg1: i32) -> (i32, i32) {
    %c0_i32 = arith.constant 0 : i32
    %c0_i32_0 = arith.constant 0 : i32
    return %c0_i32, %arg1 : i32, i32
  }
  func.func @transform_5(%arg0: i32, %arg1: i32) -> (i32, i32) {
    %c0_i32 = arith.constant 0 : i32
    return %arg0, %arg1 : i32, i32
  }
}

</mosaic_0001>

<llo_original>
// kernel: gate_forward.1
$region0: #{gate_forward.1}
  #allocation0 [shape = 'u32[]', space=smem, size = 0x4, offset = 0x4, fixed_abs, tag = 'smem constant byte address 0x4 - core index']
  #allocation1 [shape = 'u32[144,128]{1,0:T(1,128)}', space=vmem, size = 0x12000, scoped, tag = 'internal scratch']
  %s0 = inlined_call_operand.hbm [shape: f32[8,32], index: 0, kind: input, shape index: {}]
  %s1 = inlined_call_operand.hbm [shape: f32[8,32], index: 1, kind: input, shape index: {}]
  %s2 = inlined_call_operand.hbm [shape: bf16[32,128], index: 2, kind: input, shape index: {}]
  %s3 = inlined_call_operand.hbm [shape: bf16[32,128], index: 3, kind: input, shape index: {}]
  %s4 = inlined_call_operand.vmem [shape: f32[1,128], index: 4, kind: input, shape index: {}]
  %s5 = inlined_call_operand.hbm [shape: f32[8,128], index: 5, kind: output, shape index: {}]
  %s6 = sld [smem:[#allocation0]]
  $region46: #{gate_forward.1} parent=0
    _
  %s8 = ssub.s32 1, %s6
  %s9 = scalar_select 0, %s8, %s6
  $region1: #{gate_forward.1} parent=0
    #allocation2 [shape = 'u8[4096]{0}', space=vmem, size = 0x1000, scoped, tag = 'input window, operand 0, single buffered']
    #allocation3 [shape = 's32[1]{0}', space=sflag, size = 0x4, scoped, tag = 'scoped memory for gate_forward.1']
    #allocation4 [shape = 's32[1]{0}', space=sflag, size = 0x4, scoped, tag = 'scoped memory for gate_forward.1']
    #allocation5 [shape = 'u8[4096]{0}', space=vmem, size = 0x1000, scoped, tag = 'input window, operand 1, single buffered']
    #allocation6 [shape = 's32[1]{0}', space=sflag, size = 0x4, scoped, tag = 'scoped memory for gate_forward.1']
    #allocation7 [shape = 'u8[8192]{0}', space=vmem, size = 0x2000, scoped, tag = 'input window, operand 2, single buffered']
    #allocation8 [shape = 'u8[8192]{0}', space=vmem, size = 0x2000, scoped, tag = 'input window, operand 3, single buffered']
    #allocation9 [shape = 's32[1]{0}', space=sflag, size = 0x4, scoped, tag = 'scoped memory for gate_forward.1']
    #allocation10 [shape = 'u8[4096]{0}', space=vmem, size = 0x1000, scoped, tag = 'output window, operand 0, single buffered']
    %10 = vsyncpa [#allocation3], 0
    %11 = vsyncpa [#allocation6], 0
    %12 = vsyncpa [#allocation9], 0
    %13 = vsyncpa [#allocation4], 0
    // Predicated region
    $region2: #{gate_forward.1} parent=1 // pred_check
      _
    $region3: #{gate_forward.1} parent=1 // pred_check_branch
      %15 = sbr.rel (0) target = $region5
    $region4: #{gate_forward.1} parent=1 // pred_region
      %s17 = ssub.s32 128, 128
      %18 = vsyncadd [#allocation3], %s17
      %s20 = sshll.u32 [#allocation2], 4
      %s21 = int_to_ptr.vmem [resolvable:$true] %s20
      %23 = dma.hbm_to_vmem [thread:$0]  %s0, 128, %s21, [#allocation3]
    $region5: #{gate_forward.1} parent=1 // pred_fallthru
      _
    // Predicated region
    $region6: #{gate_forward.1} parent=1 // pred_check
      _
    $region7: #{gate_forward.1} parent=1 // pred_check_branch
      %25 = sbr.rel (0) target = $region9
    $region8: #{gate_forward.1} parent=1 // pred_region
      %s27 = ssub.s32 128, 128
      %28 = vsyncadd [#allocation6], %s27
      %s30 = sshll.u32 [#allocation5], 4
      %s31 = int_to_ptr.vmem [resolvable:$true] %s30
      %33 = dma.hbm_to_vmem [thread:$0]  %s1, 128, %s31, [#allocation6]
    $region9: #{gate_forward.1} parent=1 // pred_fallthru
      _
    // Predicated region
    $region10: #{gate_forward.1} parent=1 // pred_check
      _
    $region11: #{gate_forward.1} parent=1 // pred_check_branch
      %35 = sbr.rel (0) target = $region13
    $region12: #{gate_forward.1} parent=1 // pred_region
      %s37 = ssub.s32 256, 256
      %38 = vsyncadd [#allocation6], %s37
      %s39 = sshll.u32 [#allocation7], 4
      %s40 = int_to_ptr.vmem [resolvable:$true] %s39
      %45 = dma.hbm_to_vmem [thread:$0]  %s2, 256, %s40, [#allocation6], 64, 64, 4
    $region13: #{gate_forward.1} parent=1 // pred_fallthru
      _
    // Predicated region
    $region14: #{gate_forward.1} parent=1 // pred_check
      _
    $region15: #{gate_forward.1} parent=1 // pred_check_branch
      %47 = sbr.rel (0) target = $region17
    $region16: #{gate_forward.1} parent=1 // pred_region
      %s49 = ssub.s32 256, 256
      %50 = vsyncadd [#allocation9], %s49
      %s51 = sshll.u32 [#allocation8], 4
      %s52 = int_to_ptr.vmem [resolvable:$true] %s51
      %57 = dma.hbm_to_vmem [thread:$0]  %s3, 256, %s52, [#allocation9], 64, 64, 4
    $region17: #{gate_forward.1} parent=1 // pred_fallthru
      _
    // Predicated region
    $region18: #{gate_forward.1} parent=1 // pred_check
      _
    $region19: #{gate_forward.1} parent=1 // pred_check_branch
      %59 = sbr.rel (0) target = $region21
    $region20: #{gate_forward.1} parent=1 // pred_region
      _
    $region21: #{gate_forward.1} parent=1 // pred_fallthru
      _
    // Predicated region
    $region22: #{gate_forward.1} parent=1 // pred_check
      _
    $region23: #{gate_forward.1} parent=1 // pred_check_branch
      %61 = sbr.rel (0) target = $region25
    $region24: #{gate_forward.1} parent=1 // pred_region
      %62 = dma.done [#allocation3], 128
    $region25: #{gate_forward.1} parent=1 // pred_fallthru
      _
    // Predicated region
    $region26: #{gate_forward.1} parent=1 // pred_check
      _
    $region27: #{gate_forward.1} parent=1 // pred_check_branch
      %64 = sbr.rel (0) target = $region29
    $region28: #{gate_forward.1} parent=1 // pred_region
      %65 = dma.done [#allocation6], 128
    $region29: #{gate_forward.1} parent=1 // pred_fallthru
      _
    // Predicated region
    $region30: #{gate_forward.1} parent=1 // pred_check
      _
    $region31: #{gate_forward.1} parent=1 // pred_check_branch
      %67 = sbr.rel (0) target = $region33
    $region32: #{gate_forward.1} parent=1 // pred_region
      %68 = dma.done [#allocation6], 256
    $region33: #{gate_forward.1} parent=1 // pred_fallthru
      _
    // Predicated region
    $region34: #{gate_forward.1} parent=1 // pred_check
      _
    $region35: #{gate_forward.1} parent=1 // pred_check_branch
      %70 = sbr.rel (0) target = $region37
    $region36: #{gate_forward.1} parent=1 // pred_region
      %71 = dma.done [#allocation9], 256
    $region37: #{gate_forward.1} parent=1 // pred_fallthru
      _
    %v73 = vld [vmem:[#allocation2] sm:$0xff]
    %v74 = vpack.c.bf16 %v73, %v73
    %v75 = vld [vmem:[#allocation7] sm:$0xf]
    %v76 = vld [vmem:[#allocation7 + $0x4] sm:$0xf]
    %v77 = vld [vmem:[#allocation7 + $0x8] sm:$0xf]
    %v78 = vld [vmem:[#allocation7 + $0xc] sm:$0xf]
    %v79 = vld [vmem:[#allocation5] sm:$0xff]
    %v80 = vpack.c.bf16 %v79, %v79
    %v81 = vld [vmem:[#allocation8] sm:$0xf]
    %v82 = vld [vmem:[#allocation8 + $0x4] sm:$0xf]
    %v83 = vld [vmem:[#allocation8 + $0x8] sm:$0xf]
    %v84 = vld [vmem:[#allocation8 + $0xc] sm:$0xf]
    %v89 = vunpack.c.l.b16 %v81
    %v90 = vunpack.c.l.b16 %v82
    %v91 = vunpack.c.l.b16 %v83
    %v92 = vunpack.c.l.b16 %v84
    %v93 = vpack.c.b16 %v90, %v89
    %v94 = vpack.c.b16 %v92, %v91
    %vm97 = vcmask 261120
    %v99 = vsel %vm97, %v80, 0
    %101 = vmatprep.subr.bf16.mxu0 0
    %102 = vmatpush1.bf16.msra.mxu0 0
    %103 = vmatprep.subr.bf16.mxu0 0
    %104 = vmatpush1.bf16.msra.mxu0 0
    %105 = vmatprep.subr.bf16.mxu0 0
    %106 = vmatpush1.bf16.msra.mxu0 0
    %107 = vmatprep.subr.bf16.mxu0 0
    %108 = vmatpush1.bf16.msra.mxu0 0
    %109 = vmatprep.subr.bf16.mxu0 0
    %110 = vmatpush1.bf16.msra.mxu0 0
    %111 = vmatprep.subr.bf16.mxu0 0
    %112 = vmatpush1.bf16.msra.mxu0 0
    %113 = vmatprep.subr.bf16.mxu0 0
    %114 = vmatpush1.bf16.msra.mxu0 %v94
    %115 = vmatprep.subr.bf16.mxu0 0
    %116 = vmatpush1.bf16.msra.mxu0 %v93
    %117 = vmatprep.subr.bf16.mxu0 0
    %118 = vmatpush2.bf16.msra.mxu0 0
    %119 = vmatprep.subr.bf16.mxu0 0
    %120 = vmatpush2.bf16.msra.mxu0 0
    %121 = vmatprep.subr.bf16.mxu0 0
    %122 = vmatpush2.bf16.msra.mxu0 0
    %123 = vmatprep.subr.bf16.mxu0 0
    %124 = vmatpush2.bf16.msra.mxu0 0
    %125 = vmatprep.subr.bf16.mxu0 0
    %126 = vmatpush2.bf16.msra.mxu0 0
    %127 = vmatprep.subr.bf16.mxu0 0
    %128 = vmatpush2.bf16.msra.mxu0 0
    %129 = vmatprep.subr.bf16.mxu0 0
    %130 = vmatpush2.bf16.msra.mxu0 0
    %131 = vmatprep.subr.bf16.mxu0 0
    %132 = vmatpush2.bf16.msra.mxu0 0
    %133 = vmatprep.mubr.bf16.mxu0 0
    %134 = vmatmul.mubr.bf16.gmra.mxu0 %v99
    %v135 = vpop.f32.mrf.mxu0
    %v136 = vadd.f32 0.0, %v135
    %v137 = vpop.f32.mrf.mxu0
    %v138 = vpop.f32.mrf.mxu0
    %v139 = vpop.f32.mrf.mxu0
    %140 = vdwg.mxu0
    %v145 = vunpack.c.l.b16 %v75
    %v146 = vunpack.c.l.b16 %v76
    %v147 = vunpack.c.l.b16 %v77
    %v148 = vunpack.c.l.b16 %v78
    %v149 = vpack.c.b16 %v146, %v145
    %v150 = vpack.c.b16 %v148, %v147
    %v154 = vsel %vm97, %v74, 0
    %156 = vmatprep.subr.bf16.mxu0 0
    %157 = vmatpush1.bf16.msra.mxu0 0
    %158 = vmatprep.subr.bf16.mxu0 0
    %159 = vmatpush1.bf16.msra.mxu0 0
    %160 = vmatprep.subr.bf16.mxu0 0
    %161 = vmatpush1.bf16.msra.mxu0 0
    %162 = vmatprep.subr.bf16.mxu0 0
    %163 = vmatpush1.bf16.msra.mxu0 0
    %164 = vmatprep.subr.bf16.mxu0 0
    %165 = vmatpush1.bf16.msra.mxu0 0
    %166 = vmatprep.subr.bf16.mxu0 0
    %167 = vmatpush1.bf16.msra.mxu0 0
    %168 = vmatprep.subr.bf16.mxu0 0
    %169 = vmatpush1.bf16.msra.mxu0 %v150
    %170 = vmatprep.subr.bf16.mxu0 0
    %171 = vmatpush1.bf16.msra.mxu0 %v149
    %172 = vmatprep.subr.bf16.mxu0 0
    %173 = vmatpush2.bf16.msra.mxu0 0
    %174 = vmatprep.subr.bf16.mxu0 0
    %175 = vmatpush2.bf16.msra.mxu0 0
    %176 = vmatprep.subr.bf16.mxu0 0
    %177 = vmatpush2.bf16.msra.mxu0 0
    %178 = vmatprep.subr.bf16.mxu0 0
    %179 = vmatpush2.bf16.msra.mxu0 0
    %180 = vmatprep.subr.bf16.mxu0 0
    %181 = vmatpush2.bf16.msra.mxu0 0
    %182 = vmatprep.subr.bf16.mxu0 0
    %183 = vmatpush2.bf16.msra.mxu0 0
    %184 = vmatprep.subr.bf16.mxu0 0
    %185 = vmatpush2.bf16.msra.mxu0 0
    %186 = vmatprep.subr.bf16.mxu0 0
    %187 = vmatpush2.bf16.msra.mxu0 0
    %188 = vmatprep.mubr.bf16.mxu0 0
    %189 = vmatmul.mubr.bf16.gmra.mxu0 %v154
    %v190 = vpop.f32.mrf.mxu0
    %v191 = vadd.f32 %v136, %v190
    %v192 = vpop.f32.mrf.mxu0
    %v193 = vpop.f32.mrf.mxu0
    %v194 = vpop.f32.mrf.mxu0
    %195 = vdwg.mxu0
    %v196 = vld [vmem:[%s4] sm:$0x1]
    %v198 = vlaneseq
    %v199 = vshrl.u32 %v198, 7
    %v200 = vsub.s32 0, %v199
    %v201 = vrot.slane %v196, %v200
    %v203 = vadd.f32 %v191, %v201
    %v204 = vtanh.pop %v203
    %205 = vst [vmem:[#allocation10] sm:$0xff] %v204
    // Predicated region
    $region38: #{gate_forward.1} parent=1 // pred_check
      _
    $region39: #{gate_forward.1} parent=1 // pred_check_branch
      %207 = sbr.rel (0) target = $region41
    $region40: #{gate_forward.1} parent=1 // pred_region
      %s209 = ssub.s32 128, 128
      %210 = vsyncadd [#allocation4], %s209
      %s212 = sshll.u32 [#allocation10], 4
      %s213 = int_to_ptr.vmem [resolvable:$true] %s212
      %215 = dma.vmem_to_hbm [thread:$0]  %s213, 128, %s5, [#allocation4]
    $region41: #{gate_forward.1} parent=1 // pred_fallthru
      _
    // Predicated region
    $region42: #{gate_forward.1} parent=1 // pred_check
      _
    $region43: #{gate_forward.1} parent=1 // pred_check_branch
      %217 = sbr.rel (0) target = $region45
    $region44: #{gate_forward.1} parent=1 // pred_region
      %218 = dma.done [#allocation4], 128
    $region45: #{gate_forward.1} parent=1 // pred_fallthru
      _
    %219 = vsyncpa [#allocation3], 1
    %220 = vsyncpa [#allocation6], 1
    %221 = vsyncpa [#allocation9], 1
    %222 = vsyncpa [#allocation4], 1

</llo_original>
